<compile_context>
chip_gen: v5e
topology: v5e:2x2
jax: 0.10.0
libtpu: 0.0.40
codegen_flags: <defaults>
</compile_context>

<pallas_src>
import functools

import jax
import jax.numpy as jnp
from jax.experimental import pallas as pl
from jax.experimental.pallas import tpu as pltpu


def _round_up(x, m):
    return ((x + m - 1) // m) * m


def _vmem_capacity_bytes():
    """Physical VMEM per TensorCore; conservative (v7x-sized) fallback."""
    try:
        return int(pltpu.get_tpu_info().vmem_capacity_bytes)
    except Exception:
        return 64 * 1024 * 1024


# ----------------------------------------------------------------------------
# Fused MLP kernel: one (tm, K_pad) row-tile of x -> full forward pass.
#   refs = (x_ref, w_0 ... w_{L-1}, b_stack_ref, o_ref)
# Weights/biases use index_map -> (0, 0) across the M grid and Buffered(1),
# so they are fetched once and stay resident in VMEM for every row tile.
# ----------------------------------------------------------------------------
def _mlp_fused_kernel(*refs, n_layers, out_dims, compute_bf16):
    x_ref = refs[0]
    w_refs = refs[1:1 + n_layers]
    b_ref = refs[1 + n_layers]
    o_ref = refs[2 + n_layers]

    b_all = b_ref[...]                          # (L, Nmax) f32, loaded once
    h = x_ref[...]                              # (tm, K_pad) already bf16/f32
    for l in range(n_layers):
        n_out = out_dims[l]                     # static padded width of layer l
        acc = jnp.dot(h, w_refs[l][...], preferred_element_type=jnp.float32)
        acc = acc + b_all[l:l + 1, :n_out]      # f32 bias add on accumulator
        if l < n_layers - 1:
            acc = jnp.maximum(acc, 0.0)         # f32 ReLU on hidden layers
            h = acc.astype(jnp.bfloat16) if compute_bf16 else acc
        else:
            o_ref[...] = acc.astype(o_ref.dtype)


# ----------------------------------------------------------------------------
# Wrapper: pad to lane/sublane multiples, pre-cast, build specs, one pallas_call.
# ----------------------------------------------------------------------------
def net_forward_pallas(params, x, input_size, *, use_bf16=True):
    """params: list of (w, b) with w shape (fan_in, fan_out) — already transposed
    from PyTorch's (out, in).  Returns (M, output_size) f32."""
    x2 = x.reshape(-1, input_size).astype(jnp.float32)   # == x.view(-1, input_size)
    M, K = x2.shape
    n_layers = len(params)
    output_size = params[-1][0].shape[1]
    cdtype = jnp.bfloat16 if use_bf16 else jnp.float32
    cbytes = 2 if use_bf16 else 4

    # ---- zero-pad every feature dim to a 128-lane multiple; pre-cast here ---
    K_pad = _round_up(K, 128)
    w_padded, out_dims, bias_info = [], [], []
    in_dim = K_pad
    for (w, b) in params:
        k_l, n_l = w.shape
        n_pad = _round_up(n_l, 128)
        wp = jnp.zeros((in_dim, n_pad), jnp.float32).at[:k_l, :n_l].set(w)
        w_padded.append(wp.astype(cdtype))        # bf16 in HBM: half the DMA
        out_dims.append(n_pad)
        bias_info.append((b, n_l))
        in_dim = n_pad
    n_max = max(out_dims)
    b_stack = jnp.zeros((n_layers, n_max), jnp.float32)
    for l, (b, n_l) in enumerate(bias_info):
        b_stack = b_stack.at[l, :n_l].set(b)
    N_out = out_dims[-1]

    # ---- VMEM budget (enforced via vmem_limit_bytes) and M-tile sizing ------
    vmem_phys = _vmem_capacity_bytes()
    vmem_limit = max(16 << 20, min(vmem_phys // 2, 64 << 20))
    tm_max = 1024 if vmem_phys >= (96 << 20) else 512
    # weights/biases single-buffered (Buffered(1), grid-invariant):
    weight_bytes = sum(int(w.size) for w in w_padded) * cbytes + int(b_stack.size) * 4
    # per row: x tile (<=3 buffers) + out tile (2 buffers) + f32 intermediates
    per_row_bytes = 3 * K_pad * cbytes + 2 * N_out * cbytes + 2 * n_max * 4
    tm_cap = max(8, int((0.8 * vmem_limit - weight_bytes) // per_row_bytes))

    rows8 = _round_up(M, 8)
    tm = min(tm_max, tm_cap)
    if rows8 >= 16:
        # keep >= 2 grid steps so v7x's two TensorCores both get work
        tm = min(tm, max(8, (rows8 // 2) // 8 * 8))
    else:
        tm = min(tm, rows8)
    tm = max(8, (tm // 8) * 8)
    M_pad = _round_up(M, tm)
    grid = (M_pad // tm,)

    xp = jnp.zeros((M_pad, K_pad), jnp.float32).at[:M, :K].set(x2).astype(cdtype)

    # ---- cost hint for the XLA scheduler -------------------------------------
    flops = sum(2 * M_pad * int(w.shape[0]) * int(w.shape[1]) for w in w_padded)
    bytes_accessed = (int(xp.size) * cbytes
                      + sum(int(w.size) for w in w_padded) * cbytes
                      + int(b_stack.size) * 4
                      + M_pad * N_out * cbytes)
    cost = pl.CostEstimate(flops=flops, transcendentals=0,
                           bytes_accessed=bytes_accessed)

    kernel = functools.partial(_mlp_fused_kernel, n_layers=n_layers,
                               out_dims=tuple(out_dims), compute_bf16=use_bf16)

    x_bufs = min(3, max(2, grid[0]))              # deeper buffering only if useful
    in_specs = [pl.BlockSpec((tm, K_pad), lambda i: (i, 0),
                             pipeline_mode=pl.Buffered(x_bufs))]     # x row tile
    for w in w_padded:                                               # resident
        in_specs.append(pl.BlockSpec(w.shape, lambda i: (0, 0),
                                     pipeline_mode=pl.Buffered(1)))
    in_specs.append(pl.BlockSpec(b_stack.shape, lambda i: (0, 0),
                                 pipeline_mode=pl.Buffered(1)))      # biases

    out = pl.pallas_call(
        kernel,
        out_shape=jax.ShapeDtypeStruct((M_pad, N_out), cdtype),
        grid=grid,
        in_specs=in_specs,
        out_specs=pl.BlockSpec((tm, N_out), lambda i: (i, 0)),
        compiler_params=pltpu.CompilerParams(
            dimension_semantics=("parallel",),       # shard M over TCs (v7x)
            vmem_limit_bytes=int(vmem_limit)),
        cost_estimate=cost,
    )(xp, *w_padded, b_stack)

    return out[:M, :output_size].astype(jnp.float32)


# ----------------------------------------------------------------------------
# Parameter construction mirroring nn.Linear's U(-1/sqrt(fan_in), 1/sqrt(fan_in))
# ----------------------------------------------------------------------------
def init_net_params(key, input_size, hidden_sizes, output_size):
    sizes = [input_size] + list(hidden_sizes) + [output_size]
    params = []
    for i in range(len(sizes) - 1):
        fan_in, fan_out = sizes[i], sizes[i + 1]
        key, kw, kb = jax.random.split(key, 3)
        bound = 1.0 / jnp.sqrt(fan_in)
        # stored already transposed: (in, out)
        w = jax.random.uniform(kw, (fan_in, fan_out), jnp.float32, -bound, bound)
        b = jax.random.uniform(kb, (fan_out,), jnp.float32, -bound, bound)
        params.append((w, b))
    return params


if __name__ == "__main__":
    key = jax.random.PRNGKey(0)

    # NCHW input flattened into input_size features, two hidden layers, small output.
    N, C, H, W = 2, 4, 16, 16
    input_size = C * H * W          # 1024
    hidden_sizes = [32, 32]
    output_size = 10

    key, kx, kp = jax.random.split(key, 3)
    x = jax.random.normal(kx, (N, C, H, W), jnp.float32)
    params = init_net_params(kp, input_size, hidden_sizes, output_size)

    # Pure-JAX reference of the whole forward pass.
    ref = x.reshape(-1, input_size)
    for (w, b) in params[:-1]:
        ref = jnp.maximum(ref @ w + b, 0.0)
    ref = ref @ params[-1][0] + params[-1][1]

    # Strict f32 path.
    out_f32 = jax.block_until_ready(
        net_forward_pallas(params, x, input_size, use_bf16=False))
    assert out_f32.shape == (N, output_size), out_f32.shape
    assert jnp.allclose(out_f32, ref, atol=1e-4, rtol=1e-4)

    # bf16-fed MXU path (default; halves HBM traffic) — looser tolerance expected.
    out_bf16 = jax.block_until_ready(
        net_forward_pallas(params, x, input_size, use_bf16=True))
    assert out_bf16.shape == (N, output_size), out_bf16.shape
    assert jnp.allclose(out_bf16, ref, atol=3e-2, rtol=3e-2)

    print("KERNEL_OK")
</pallas_src>

<mosaic_0001>
module attributes {stable_mosaic.version = 11 : i64} {
  func.func @_mlp_fused_kernel(%arg0: i32, %arg1: memref<8x1024xf32, #tpu.memory_space<vmem>>, %arg2: memref<1024x128xf32, #tpu.memory_space<vmem>>, %arg3: memref<128x128xf32, #tpu.memory_space<vmem>>, %arg4: memref<128x128xf32, #tpu.memory_space<vmem>>, %arg5: memref<3x128xf32, #tpu.memory_space<vmem>>, %arg6: memref<8x128xf32, #tpu.memory_space<vmem>>) attributes {dimension_semantics = [#tpu.dimension_semantics<parallel>], iteration_bounds = array<i64: 1>, scalar_prefetch = 0 : i64, scratch_operands = 0 : i64, tpu.core_type = #tpu.core_type<tc>, window_params = [{pipeline_mode = #tpu.pipeline_mode<double_buffered>, transform_indices = @transform_0, window_bounds = array<i64: 8, 1024>}, {pipeline_mode = #tpu.pipeline_mode<synchronous>, transform_indices = @transform_1, window_bounds = array<i64: 1024, 128>}, {pipeline_mode = #tpu.pipeline_mode<synchronous>, transform_indices = @transform_2, window_bounds = array<i64: 128, 128>}, {pipeline_mode = #tpu.pipeline_mode<synchronous>, transform_indices = @transform_3, window_bounds = array<i64: 128, 128>}, {pipeline_mode = #tpu.pipeline_mode<synchronous>, transform_indices = @transform_4, window_bounds = array<i64: 3, 128>}, {transform_indices = @transform_5, window_bounds = array<i64: 8, 128>}]} {
    %c0 = arith.constant 0 : index
    %c0_0 = arith.constant 0 : index
    %0 = vector.load %arg5[%c0, %c0_0] : memref<3x128xf32, #tpu.memory_space<vmem>>, vector<3x128xf32>
    %c0_1 = arith.constant 0 : index
    %c0_2 = arith.constant 0 : index
    %1 = vector.load %arg1[%c0_1, %c0_2] : memref<8x1024xf32, #tpu.memory_space<vmem>>, vector<8x1024xf32>
    %c0_3 = arith.constant 0 : index
    %c0_4 = arith.constant 0 : index
    %2 = vector.load %arg2[%c0_3, %c0_4] : memref<1024x128xf32, #tpu.memory_space<vmem>>, vector<1024x128xf32>
    %cst = arith.constant dense<0.000000e+00> : vector<8x128xf32>
    %3 = tpu.matmul %1, %2, %cst {dimension_numbers = #tpu.dot_dimension_numbers<[1], [0], [0], [1], [0, 0, 1, 1], [], []>} : vector<8x1024xf32>, vector<1024x128xf32>, vector<8x128xf32> -> vector<8x128xf32>
    %4 = vector.extract_strided_slice %0 {offsets = [0, 0], sizes = [1, 128], strides = [1, 1]} : vector<3x128xf32> to vector<1x128xf32>
    %5 = vector.broadcast %4 : vector<1x128xf32> to vector<8x128xf32>
    %6 = arith.addf %3, %5 : vector<8x128xf32>
    %cst_5 = arith.constant 0.000000e+00 : f32
    %7 = vector.broadcast %cst_5 : f32 to vector<8x128xf32>
    %8 = arith.maximumf %6, %7 : vector<8x128xf32>
    %c0_6 = arith.constant 0 : index
    %c0_7 = arith.constant 0 : index
    %9 = vector.load %arg3[%c0_6, %c0_7] : memref<128x128xf32, #tpu.memory_space<vmem>>, vector<128x128xf32>
    %cst_8 = arith.constant dense<0.000000e+00> : vector<8x128xf32>
    %10 = tpu.matmul %8, %9, %cst_8 {dimension_numbers = #tpu.dot_dimension_numbers<[1], [0], [0], [1], [0, 0, 1, 1], [], []>} : vector<8x128xf32>, vector<128x128xf32>, vector<8x128xf32> -> vector<8x128xf32>
    %11 = vector.extract_strided_slice %0 {offsets = [1, 0], sizes = [1, 128], strides = [1, 1]} : vector<3x128xf32> to vector<1x128xf32>
    %12 = vector.broadcast %11 : vector<1x128xf32> to vector<8x128xf32>
    %13 = arith.addf %10, %12 : vector<8x128xf32>
    %cst_9 = arith.constant 0.000000e+00 : f32
    %14 = vector.broadcast %cst_9 : f32 to vector<8x128xf32>
    %15 = arith.maximumf %13, %14 : vector<8x128xf32>
    %c0_10 = arith.constant 0 : index
    %c0_11 = arith.constant 0 : index
    %16 = vector.load %arg4[%c0_10, %c0_11] : memref<128x128xf32, #tpu.memory_space<vmem>>, vector<128x128xf32>
    %cst_12 = arith.constant dense<0.000000e+00> : vector<8x128xf32>
    %17 = tpu.matmul %15, %16, %cst_12 {dimension_numbers = #tpu.dot_dimension_numbers<[1], [0], [0], [1], [0, 0, 1, 1], [], []>} : vector<8x128xf32>, vector<128x128xf32>, vector<8x128xf32> -> vector<8x128xf32>
    %18 = vector.extract_strided_slice %0 {offsets = [2, 0], sizes = [1, 128], strides = [1, 1]} : vector<3x128xf32> to vector<1x128xf32>
    %19 = vector.broadcast %18 : vector<1x128xf32> to vector<8x128xf32>
    %20 = arith.addf %17, %19 : vector<8x128xf32>
    %c0_13 = arith.constant 0 : index
    %c0_14 = arith.constant 0 : index
    %21 = vector.load %arg6[%c0_13, %c0_14] : memref<8x128xf32, #tpu.memory_space<vmem>>, vector<8x128xf32>
    tpu.vector_store %arg6[%c0_13, %c0_14], %20 {strides = array<i32>} : memref<8x128xf32, #tpu.memory_space<vmem>>, vector<8x128xf32>,
    return
  }
  func.func @transform_0(%arg0: i32) -> (i32, i32) {
    %c0_i32 = arith.constant 0 : i32
    %c0_i32_0 = arith.constant 0 : i32
    return %arg0, %c0_i32 : i32, i32
  }
  func.func @transform_1(%arg0: i32) -> (i32, i32) {
    %c0_i32 = arith.constant 0 : i32
    %c0_i32_0 = arith.constant 0 : i32
    %c0_i32_1 = arith.constant 0 : i32
    return %c0_i32, %c0_i32_0 : i32, i32
  }
  func.func @transform_2(%arg0: i32) -> (i32, i32) {
    %c0_i32 = arith.constant 0 : i32
    %c0_i32_0 = arith.constant 0 : i32
    %c0_i32_1 = arith.constant 0 : i32
    return %c0_i32, %c0_i32_0 : i32, i32
  }
  func.func @transform_3(%arg0: i32) -> (i32, i32) {
    %c0_i32 = arith.constant 0 : i32
    %c0_i32_0 = arith.constant 0 : i32
    %c0_i32_1 = arith.constant 0 : i32
    return %c0_i32, %c0_i32_0 : i32, i32
  }
  func.func @transform_4(%arg0: i32) -> (i32, i32) {
    %c0_i32 = arith.constant 0 : i32
    %c0_i32_0 = arith.constant 0 : i32
    %c0_i32_1 = arith.constant 0 : i32
    return %c0_i32, %c0_i32_0 : i32, i32
  }
  func.func @transform_5(%arg0: i32) -> (i32, i32) {
    %c0_i32 = arith.constant 0 : i32
    %c0_i32_0 = arith.constant 0 : i32
    return %arg0, %c0_i32 : i32, i32
  }
}

</mosaic_0001>

<llo_original>
// kernel: tpu_custom_call.1
$region0: #{tpu_custom_call.1}
  #allocation0 [shape = 'u32[]', space=smem, size = 0x4, offset = 0x4, fixed_abs, tag = 'smem constant byte address 0x4 - core index']
  #allocation1 [shape = 'u32[72,128]{1,0:T(1,128)}', space=vmem, size = 0x9000, scoped, tag = 'internal scratch']
  %s0 = inlined_call_operand.hbm [shape: f32[8,1024], index: 0, kind: input, shape index: {}]
  %s1 = inlined_call_operand.hbm [shape: f32[1024,128], index: 1, kind: input, shape index: {}]
  %s2 = inlined_call_operand.hbm [shape: f32[128,128], index: 2, kind: input, shape index: {}]
  %s3 = inlined_call_operand.hbm [shape: f32[128,128], index: 3, kind: input, shape index: {}]
  %s4 = inlined_call_operand.hbm [shape: f32[3,128], index: 4, kind: input, shape index: {}]
  %s5 = inlined_call_operand.hbm [shape: f32[8,128], index: 5, kind: output, shape index: {}]
  %s6 = sld [smem:[#allocation0]]
  $region50: #{tpu_custom_call.1} parent=0
    _
  %s8 = ssub.s32 1, %s6
  %s9 = scalar_select 0, %s8, %s6
  $region1: #{tpu_custom_call.1} parent=0
    #allocation2 [shape = 'u8[32768]{0}', space=vmem, size = 0x8000, scoped, tag = 'input window, operand 0, single buffered']
    #allocation3 [shape = 's32[1]{0}', space=sflag, size = 0x4, scoped, tag = 'scoped memory for tpu_custom_call.1']
    #allocation4 [shape = 's32[1]{0}', space=sflag, size = 0x4, scoped, tag = 'scoped memory for tpu_custom_call.1']
    #allocation5 [shape = 'u8[524288]{0}', space=vmem, size = 0x80000, scoped, tag = 'input window, operand 1, single buffered']
    #allocation6 [shape = 's32[1]{0}', space=sflag, size = 0x4, scoped, tag = 'scoped memory for tpu_custom_call.1']
    #allocation7 [shape = 'u8[65536]{0}', space=vmem, size = 0x10000, scoped, tag = 'input window, operand 2, single buffered']
    #allocation8 [shape = 'u8[65536]{0}', space=vmem, size = 0x10000, scoped, tag = 'input window, operand 3, single buffered']
    #allocation9 [shape = 's32[1]{0}', space=sflag, size = 0x4, scoped, tag = 'scoped memory for tpu_custom_call.1']
    #allocation10 [shape = 'u8[2048]{0}', space=vmem, size = 0x800, scoped, tag = 'input window, operand 4, single buffered']
    #allocation11 [shape = 'u8[4096]{0}', space=vmem, size = 0x1000, scoped, tag = 'output window, operand 0, single buffered']
    %10 = vsyncpa [#allocation3], 0
    %11 = vsyncpa [#allocation6], 0
    %12 = vsyncpa [#allocation9], 0
    %13 = vsyncpa [#allocation4], 0
    // Predicated region
    $region2: #{tpu_custom_call.1} parent=1 // pred_check
      _
    $region3: #{tpu_custom_call.1} parent=1 // pred_check_branch
      %15 = sbr.rel (0) target = $region5
    $region4: #{tpu_custom_call.1} parent=1 // pred_region
      %17 = vsyncadd [#allocation3], 0
      %s19 = sshll.u32 %s0, 4
      %s20 = int_to_ptr.hbm [resolvable:$true] %s19
      %s21 = sshll.u32 [#allocation2], 4
      %s22 = int_to_ptr.vmem [resolvable:$true] %s21
      %24 = dma.hbm_to_vmem [thread:$0]  %s20, 1024, %s22, [#allocation3]
    $region5: #{tpu_custom_call.1} parent=1 // pred_fallthru
      _
    // Predicated region
    $region6: #{tpu_custom_call.1} parent=1 // pred_check
      _
    $region7: #{tpu_custom_call.1} parent=1 // pred_check_branch
      %26 = sbr.rel (0) target = $region9
    $region8: #{tpu_custom_call.1} parent=1 // pred_region
      %28 = vsyncadd [#allocation6], 0
      %s29 = sshll.u32 %s1, 4
      %s30 = int_to_ptr.hbm [resolvable:$true] %s29
      %s31 = sshll.u32 [#allocation5], 4
      %s32 = int_to_ptr.vmem [resolvable:$true] %s31
      %37 = dma.hbm_to_vmem [thread:$0]  %s30, 16384, %s32, [#allocation6], 128, 128, 8
    $region9: #{tpu_custom_call.1} parent=1 // pred_fallthru
      _
    // Predicated region
    $region10: #{tpu_custom_call.1} parent=1 // pred_check
      _
    $region11: #{tpu_custom_call.1} parent=1 // pred_check_branch
      %39 = sbr.rel (0) target = $region13
    $region12: #{tpu_custom_call.1} parent=1 // pred_region
      %41 = vsyncadd [#allocation6], 0
      %s42 = sshll.u32 %s2, 4
      %s43 = int_to_ptr.hbm [resolvable:$true] %s42
      %s44 = sshll.u32 [#allocation7], 4
      %s45 = int_to_ptr.vmem [resolvable:$true] %s44
      %50 = dma.hbm_to_vmem [thread:$0]  %s43, 2048, %s45, [#allocation6], 128, 128, 8
    $region13: #{tpu_custom_call.1} parent=1 // pred_fallthru
      _
    // Predicated region
    $region14: #{tpu_custom_call.1} parent=1 // pred_check
      _
    $region15: #{tpu_custom_call.1} parent=1 // pred_check_branch
      %52 = sbr.rel (0) target = $region17
    $region16: #{tpu_custom_call.1} parent=1 // pred_region
      %54 = vsyncadd [#allocation9], 0
      %s55 = sshll.u32 %s3, 4
      %s56 = int_to_ptr.hbm [resolvable:$true] %s55
      %s57 = sshll.u32 [#allocation8], 4
      %s58 = int_to_ptr.vmem [resolvable:$true] %s57
      %63 = dma.hbm_to_vmem [thread:$0]  %s56, 2048, %s58, [#allocation9], 128, 128, 8
    $region17: #{tpu_custom_call.1} parent=1 // pred_fallthru
      _
    // Predicated region
    $region18: #{tpu_custom_call.1} parent=1 // pred_check
      _
    $region19: #{tpu_custom_call.1} parent=1 // pred_check_branch
      %65 = sbr.rel (0) target = $region21
    $region20: #{tpu_custom_call.1} parent=1 // pred_region
      %67 = vsyncadd [#allocation9], 0
      %s69 = sshll.u32 %s4, 4
      %s70 = int_to_ptr.hbm [resolvable:$true] %s69
      %s71 = sshll.u32 [#allocation10], 4
      %s72 = int_to_ptr.vmem [resolvable:$true] %s71
      %74 = dma.hbm_to_vmem [thread:$0]  %s70, 64, %s72, [#allocation9]
    $region21: #{tpu_custom_call.1} parent=1 // pred_fallthru
      _
    // Predicated region
    $region22: #{tpu_custom_call.1} parent=1 // pred_check
      _
    $region23: #{tpu_custom_call.1} parent=1 // pred_check_branch
      %76 = sbr.rel (0) target = $region25
    $region24: #{tpu_custom_call.1} parent=1 // pred_region
      %78 = dma.done [#allocation3], 1024
    $region25: #{tpu_custom_call.1} parent=1 // pred_fallthru
      _
    // Predicated region
    $region26: #{tpu_custom_call.1} parent=1 // pred_check
      _
    $region27: #{tpu_custom_call.1} parent=1 // pred_check_branch
      %80 = sbr.rel (0) target = $region29
    $region28: #{tpu_custom_call.1} parent=1 // pred_region
      %82 = dma.done [#allocation6], 16384
    $region29: #{tpu_custom_call.1} parent=1 // pred_fallthru
      _
    // Predicated region
    $region30: #{tpu_custom_call.1} parent=1 // pred_check
      _
    $region31: #{tpu_custom_call.1} parent=1 // pred_check_branch
      %84 = sbr.rel (0) target = $region33
    $region32: #{tpu_custom_call.1} parent=1 // pred_region
      %86 = dma.done [#allocation6], 2048
    $region33: #{tpu_custom_call.1} parent=1 // pred_fallthru
      _
    // Predicated region
    $region34: #{tpu_custom_call.1} parent=1 // pred_check
      _
    $region35: #{tpu_custom_call.1} parent=1 // pred_check_branch
      %88 = sbr.rel (0) target = $region37
    $region36: #{tpu_custom_call.1} parent=1 // pred_region
      %90 = dma.done [#allocation9], 2048
    $region37: #{tpu_custom_call.1} parent=1 // pred_fallthru
      _
    // Predicated region
    $region38: #{tpu_custom_call.1} parent=1 // pred_check
      _
    $region39: #{tpu_custom_call.1} parent=1 // pred_check_branch
      %92 = sbr.rel (0) target = $region41
    $region40: #{tpu_custom_call.1} parent=1 // pred_region
      %94 = dma.done [#allocation9], 64
    $region41: #{tpu_custom_call.1} parent=1 // pred_fallthru
      _
    %v95 = vld [vmem:[#allocation10] sm:$0x7]
    %v96 = vld [vmem:[#allocation2] sm:$0xff]
    %v97 = vld [vmem:[#allocation2 + $0x8] sm:$0xff]
    %v98 = vld [vmem:[#allocation2 + $0x10] sm:$0xff]
    %v99 = vld [vmem:[#allocation2 + $0x18] sm:$0xff]
    %v100 = vld [vmem:[#allocation2 + $0x20] sm:$0xff]
    %v101 = vld [vmem:[#allocation2 + $0x28] sm:$0xff]
    %v102 = vld [vmem:[#allocation2 + $0x30] sm:$0xff]
    %v103 = vld [vmem:[#allocation2 + $0x38] sm:$0xff]
    %v104 = vld [vmem:[#allocation5] sm:$0xff]
    %v105 = vld [vmem:[#allocation5 + $0x8] sm:$0xff]
    %v106 = vld [vmem:[#allocation5 + $0x10] sm:$0xff]
    %v107 = vld [vmem:[#allocation5 + $0x18] sm:$0xff]
    %v108 = vld [vmem:[#allocation5 + $0x20] sm:$0xff]
    %v109 = vld [vmem:[#allocation5 + $0x28] sm:$0xff]
    %v110 = vld [vmem:[#allocation5 + $0x30] sm:$0xff]
    %v111 = vld [vmem:[#allocation5 + $0x38] sm:$0xff]
    %v112 = vld [vmem:[#allocation5 + $0x40] sm:$0xff]
    %v113 = vld [vmem:[#allocation5 + $0x48] sm:$0xff]
    %v114 = vld [vmem:[#allocation5 + $0x50] sm:$0xff]
    %v115 = vld [vmem:[#allocation5 + $0x58] sm:$0xff]
    %v116 = vld [vmem:[#allocation5 + $0x60] sm:$0xff]
    %v117 = vld [vmem:[#allocation5 + $0x68] sm:$0xff]
    %v118 = vld [vmem:[#allocation5 + $0x70] sm:$0xff]
    %v119 = vld [vmem:[#allocation5 + $0x78] sm:$0xff]
    %v120 = vld [vmem:[#allocation5 + $0x80] sm:$0xff]
    %v121 = vld [vmem:[#allocation5 + $0x88] sm:$0xff]
    %v122 = vld [vmem:[#allocation5 + $0x90] sm:$0xff]
    %v123 = vld [vmem:[#allocation5 + $0x98] sm:$0xff]
    %v124 = vld [vmem:[#allocation5 + $0xa0] sm:$0xff]
    %v125 = vld [vmem:[#allocation5 + $0xa8] sm:$0xff]
    %v126 = vld [vmem:[#allocation5 + $0xb0] sm:$0xff]
    %v127 = vld [vmem:[#allocation5 + $0xb8] sm:$0xff]
    %v128 = vld [vmem:[#allocation5 + $0xc0] sm:$0xff]
    %v129 = vld [vmem:[#allocation5 + $0xc8] sm:$0xff]
    %v130 = vld [vmem:[#allocation5 + $0xd0] sm:$0xff]
    %v131 = vld [vmem:[#allocation5 + $0xd8] sm:$0xff]
    %v132 = vld [vmem:[#allocation5 + $0xe0] sm:$0xff]
    %v133 = vld [vmem:[#allocation5 + $0xe8] sm:$0xff]
    %v134 = vld [vmem:[#allocation5 + $0xf0] sm:$0xff]
    %v135 = vld [vmem:[#allocation5 + $0xf8] sm:$0xff]
    %v136 = vld [vmem:[#allocation5 + $0x100] sm:$0xff]
    %v137 = vld [vmem:[#allocation5 + $0x108] sm:$0xff]
    %v138 = vld [vmem:[#allocation5 + $0x110] sm:$0xff]
    %v139 = vld [vmem:[#allocation5 + $0x118] sm:$0xff]
    %v140 = vld [vmem:[#allocation5 + $0x120] sm:$0xff]
    %v141 = vld [vmem:[#allocation5 + $0x128] sm:$0xff]
    %v142 = vld [vmem:[#allocation5 + $0x130] sm:$0xff]
    %v143 = vld [vmem:[#allocation5 + $0x138] sm:$0xff]
    %v144 = vld [vmem:[#allocation5 + $0x140] sm:$0xff]
    %v145 = vld [vmem:[#allocation5 + $0x148] sm:$0xff]
    %v146 = vld [vmem:[#allocation5 + $0x150] sm:$0xff]
    %v147 = vld [vmem:[#allocation5 + $0x158] sm:$0xff]
    %v148 = vld [vmem:[#allocation5 + $0x160] sm:$0xff]
    %v149 = vld [vmem:[#allocation5 + $0x168] sm:$0xff]
    %v150 = vld [vmem:[#allocation5 + $0x170] sm:$0xff]
    %v151 = vld [vmem:[#allocation5 + $0x178] sm:$0xff]
    %v152 = vld [vmem:[#allocation5 + $0x180] sm:$0xff]
    %v153 = vld [vmem:[#allocation5 + $0x188] sm:$0xff]
    %v154 = vld [vmem:[#allocation5 + $0x190] sm:$0xff]
    %v155 = vld [vmem:[#allocation5 + $0x198] sm:$0xff]
    %v156 = vld [vmem:[#allocation5 + $0x1a0] sm:$0xff]
    %v157 = vld [vmem:[#allocation5 + $0x1a8] sm:$0xff]
    %v158 = vld [vmem:[#allocation5 + $0x1b0] sm:$0xff]
    %v159 = vld [vmem:[#allocation5 + $0x1b8] sm:$0xff]
    %v160 = vld [vmem:[#allocation5 + $0x1c0] sm:$0xff]
    %v161 = vld [vmem:[#allocation5 + $0x1c8] sm:$0xff]
    %v162 = vld [vmem:[#allocation5 + $0x1d0] sm:$0xff]
    %v163 = vld [vmem:[#allocation5 + $0x1d8] sm:$0xff]
    %v164 = vld [vmem:[#allocation5 + $0x1e0] sm:$0xff]
    %v165 = vld [vmem:[#allocation5 + $0x1e8] sm:$0xff]
    %v166 = vld [vmem:[#allocation5 + $0x1f0] sm:$0xff]
    %v167 = vld [vmem:[#allocation5 + $0x1f8] sm:$0xff]
    %v168 = vld [vmem:[#allocation5 + $0x200] sm:$0xff]
    %v169 = vld [vmem:[#allocation5 + $0x208] sm:$0xff]
    %v170 = vld [vmem:[#allocation5 + $0x210] sm:$0xff]
    %v171 = vld [vmem:[#allocation5 + $0x218] sm:$0xff]
    %v172 = vld [vmem:[#allocation5 + $0x220] sm:$0xff]
    %v173 = vld [vmem:[#allocation5 + $0x228] sm:$0xff]
    %v174 = vld [vmem:[#allocation5 + $0x230] sm:$0xff]
    %v175 = vld [vmem:[#allocation5 + $0x238] sm:$0xff]
    %v176 = vld [vmem:[#allocation5 + $0x240] sm:$0xff]
    %v177 = vld [vmem:[#allocation5 + $0x248] sm:$0xff]
    %v178 = vld [vmem:[#allocation5 + $0x250] sm:$0xff]
    %v179 = vld [vmem:[#allocation5 + $0x258] sm:$0xff]
    %v180 = vld [vmem:[#allocation5 + $0x260] sm:$0xff]
    %v181 = vld [vmem:[#allocation5 + $0x268] sm:$0xff]
    %v182 = vld [vmem:[#allocation5 + $0x270] sm:$0xff]
    %v183 = vld [vmem:[#allocation5 + $0x278] sm:$0xff]
    %v184 = vld [vmem:[#allocation5 + $0x280] sm:$0xff]
    %v185 = vld [vmem:[#allocation5 + $0x288] sm:$0xff]
    %v186 = vld [vmem:[#allocation5 + $0x290] sm:$0xff]
    %v187 = vld [vmem:[#allocation5 + $0x298] sm:$0xff]
    %v188 = vld [vmem:[#allocation5 + $0x2a0] sm:$0xff]
    %v189 = vld [vmem:[#allocation5 + $0x2a8] sm:$0xff]
    %v190 = vld [vmem:[#allocation5 + $0x2b0] sm:$0xff]
    %v191 = vld [vmem:[#allocation5 + $0x2b8] sm:$0xff]
    %v192 = vld [vmem:[#allocation5 + $0x2c0] sm:$0xff]
    %v193 = vld [vmem:[#allocation5 + $0x2c8] sm:$0xff]
    %v194 = vld [vmem:[#allocation5 + $0x2d0] sm:$0xff]
    %v195 = vld [vmem:[#allocation5 + $0x2d8] sm:$0xff]
    %v196 = vld [vmem:[#allocation5 + $0x2e0] sm:$0xff]
    %v197 = vld [vmem:[#allocation5 + $0x2e8] sm:$0xff]
    %v198 = vld [vmem:[#allocation5 + $0x2f0] sm:$0xff]
    %v199 = vld [vmem:[#allocation5 + $0x2f8] sm:$0xff]
    %v200 = vld [vmem:[#allocation5 + $0x300] sm:$0xff]
    %v201 = vld [vmem:[#allocation5 + $0x308] sm:$0xff]
    %v202 = vld [vmem:[#allocation5 + $0x310] sm:$0xff]
    %v203 = vld [vmem:[#allocation5 + $0x318] sm:$0xff]
    %v204 = vld [vmem:[#allocation5 + $0x320] sm:$0xff]
    %v205 = vld [vmem:[#allocation5 + $0x328] sm:$0xff]
    %v206 = vld [vmem:[#allocation5 + $0x330] sm:$0xff]
    %v207 = vld [vmem:[#allocation5 + $0x338] sm:$0xff]
    %v208 = vld [vmem:[#allocation5 + $0x340] sm:$0xff]
    %v209 = vld [vmem:[#allocation5 + $0x348] sm:$0xff]
    %v210 = vld [vmem:[#allocation5 + $0x350] sm:$0xff]
    %v211 = vld [vmem:[#allocation5 + $0x358] sm:$0xff]
    %v212 = vld [vmem:[#allocation5 + $0x360] sm:$0xff]
    %v213 = vld [vmem:[#allocation5 + $0x368] sm:$0xff]
    %v214 = vld [vmem:[#allocation5 + $0x370] sm:$0xff]
    %v215 = vld [vmem:[#allocation5 + $0x378] sm:$0xff]
    %v216 = vld [vmem:[#allocation5 + $0x380] sm:$0xff]
    %v217 = vld [vmem:[#allocation5 + $0x388] sm:$0xff]
    %v218 = vld [vmem:[#allocation5 + $0x390] sm:$0xff]
    %v219 = vld [vmem:[#allocation5 + $0x398] sm:$0xff]
    %v220 = vld [vmem:[#allocation5 + $0x3a0] sm:$0xff]
    %v221 = vld [vmem:[#allocation5 + $0x3a8] sm:$0xff]
    %v222 = vld [vmem:[#allocation5 + $0x3b0] sm:$0xff]
    %v223 = vld [vmem:[#allocation5 + $0x3b8] sm:$0xff]
    %v224 = vld [vmem:[#allocation5 + $0x3c0] sm:$0xff]
    %v225 = vld [vmem:[#allocation5 + $0x3c8] sm:$0xff]
    %v226 = vld [vmem:[#allocation5 + $0x3d0] sm:$0xff]
    %v227 = vld [vmem:[#allocation5 + $0x3d8] sm:$0xff]
    %v228 = vld [vmem:[#allocation5 + $0x3e0] sm:$0xff]
    %v229 = vld [vmem:[#allocation5 + $0x3e8] sm:$0xff]
    %v230 = vld [vmem:[#allocation5 + $0x3f0] sm:$0xff]
    %v231 = vld [vmem:[#allocation5 + $0x3f8] sm:$0xff]
    %v232 = vperm.slane %v95, 0
    %233 = vmatpush.msra.mxu0 %v119
    %234 = vmatpush.msra.mxu0 %v118
    %235 = vmatpush.msra.mxu0 %v117
    %236 = vmatpush.msra.mxu0 %v116
    %237 = vmatpush.msra.mxu0 %v115
    %238 = vmatpush.msra.mxu0 %v114
    %239 = vmatpush.msra.mxu0 %v113
    %240 = vmatpush.msra.mxu0 %v112
    %241 = vmatpush.msra.mxu0 %v111
    %242 = vmatpush.msra.mxu0 %v110
    %243 = vmatpush.msra.mxu0 %v109
    %244 = vmatpush.msra.mxu0 %v108
    %245 = vmatpush.msra.mxu0 %v107
    %246 = vmatpush.msra.mxu0 %v106
    %247 = vmatpush.msra.mxu0 %v105
    %248 = vmatpush.msra.mxu0 %v104
    %249 = vmatmul.f32.gmra.mxu0 %v96
    %v250 = vpop.f32.mrf.mxu0
    %v251 = vadd.f32 %v232, %v250
    %252 = vdwg.mxu0
    %253 = vmatpush.msra.mxu0 %v135
    %254 = vmatpush.msra.mxu0 %v134
    %255 = vmatpush.msra.mxu0 %v133
    %256 = vmatpush.msra.mxu0 %v132
    %257 = vmatpush.msra.mxu0 %v131
    %258 = vmatpush.msra.mxu0 %v130
    %259 = vmatpush.msra.mxu0 %v129
    %260 = vmatpush.msra.mxu0 %v128
    %261 = vmatpush.msra.mxu0 %v127
    %262 = vmatpush.msra.mxu0 %v126
    %263 = vmatpush.msra.mxu0 %v125
    %264 = vmatpush.msra.mxu0 %v124
    %265 = vmatpush.msra.mxu0 %v123
    %266 = vmatpush.msra.mxu0 %v122
    %267 = vmatpush.msra.mxu0 %v121
    %268 = vmatpush.msra.mxu0 %v120
    %269 = vmatmul.f32.gmra.mxu0 %v97
    %v270 = vpop.f32.mrf.mxu0
    %v271 = vadd.f32 %v251, %v270
    %272 = vdwg.mxu0
    %273 = vmatpush.msra.mxu0 %v151
    %274 = vmatpush.msra.mxu0 %v150
    %275 = vmatpush.msra.mxu0 %v149
    %276 = vmatpush.msra.mxu0 %v148
    %277 = vmatpush.msra.mxu0 %v147
    %278 = vmatpush.msra.mxu0 %v146
    %279 = vmatpush.msra.mxu0 %v145
    %280 = vmatpush.msra.mxu0 %v144
    %281 = vmatpush.msra.mxu0 %v143
    %282 = vmatpush.msra.mxu0 %v142
    %283 = vmatpush.msra.mxu0 %v141
    %284 = vmatpush.msra.mxu0 %v140
    %285 = vmatpush.msra.mxu0 %v139
    %286 = vmatpush.msra.mxu0 %v138
    %287 = vmatpush.msra.mxu0 %v137
    %288 = vmatpush.msra.mxu0 %v136
    %289 = vmatmul.f32.gmra.mxu0 %v98
    %v290 = vpop.f32.mrf.mxu0
    %v291 = vadd.f32 %v271, %v290
    %292 = vdwg.mxu0
    %293 = vmatpush.msra.mxu0 %v167
    %294 = vmatpush.msra.mxu0 %v166
    %295 = vmatpush.msra.mxu0 %v165
    %296 = vmatpush.msra.mxu0 %v164
    %297 = vmatpush.msra.mxu0 %v163
    %298 = vmatpush.msra.mxu0 %v162
    %299 = vmatpush.msra.mxu0 %v161
    %300 = vmatpush.msra.mxu0 %v160
    %301 = vmatpush.msra.mxu0 %v159
    %302 = vmatpush.msra.mxu0 %v158
    %303 = vmatpush.msra.mxu0 %v157
    %304 = vmatpush.msra.mxu0 %v156
    %305 = vmatpush.msra.mxu0 %v155
    %306 = vmatpush.msra.mxu0 %v154
    %307 = vmatpush.msra.mxu0 %v153
    %308 = vmatpush.msra.mxu0 %v152
    %309 = vmatmul.f32.gmra.mxu0 %v99
    %v310 = vpop.f32.mrf.mxu0
    %v311 = vadd.f32 %v291, %v310
    %312 = vdwg.mxu0
    %313 = vmatpush.msra.mxu0 %v183
    %314 = vmatpush.msra.mxu0 %v182
    %315 = vmatpush.msra.mxu0 %v181
    %316 = vmatpush.msra.mxu0 %v180
    %317 = vmatpush.msra.mxu0 %v179
    %318 = vmatpush.msra.mxu0 %v178
    %319 = vmatpush.msra.mxu0 %v177
    %320 = vmatpush.msra.mxu0 %v176
    %321 = vmatpush.msra.mxu0 %v175
    %322 = vmatpush.msra.mxu0 %v174
    %323 = vmatpush.msra.mxu0 %v173
    %324 = vmatpush.msra.mxu0 %v172
    %325 = vmatpush.msra.mxu0 %v171
    %326 = vmatpush.msra.mxu0 %v170
    %327 = vmatpush.msra.mxu0 %v169
    %328 = vmatpush.msra.mxu0 %v168
    %329 = vmatmul.f32.gmra.mxu0 %v100
    %v330 = vpop.f32.mrf.mxu0
    %v331 = vadd.f32 %v311, %v330
    %332 = vdwg.mxu0
    %333 = vmatpush.msra.mxu0 %v199
    %334 = vmatpush.msra.mxu0 %v198
    %335 = vmatpush.msra.mxu0 %v197
    %336 = vmatpush.msra.mxu0 %v196
    %337 = vmatpush.msra.mxu0 %v195
    %338 = vmatpush.msra.mxu0 %v194
    %339 = vmatpush.msra.mxu0 %v193
    %340 = vmatpush.msra.mxu0 %v192
    %341 = vmatpush.msra.mxu0 %v191
    %342 = vmatpush.msra.mxu0 %v190
    %343 = vmatpush.msra.mxu0 %v189
    %344 = vmatpush.msra.mxu0 %v188
    %345 = vmatpush.msra.mxu0 %v187
    %346 = vmatpush.msra.mxu0 %v186
    %347 = vmatpush.msra.mxu0 %v185
    %348 = vmatpush.msra.mxu0 %v184
    %349 = vmatmul.f32.gmra.mxu0 %v101
    %v350 = vpop.f32.mrf.mxu0
    %v351 = vadd.f32 %v331, %v350
    %352 = vdwg.mxu0
    %353 = vmatpush.msra.mxu0 %v215
    %354 = vmatpush.msra.mxu0 %v214
    %355 = vmatpush.msra.mxu0 %v213
    %356 = vmatpush.msra.mxu0 %v212
    %357 = vmatpush.msra.mxu0 %v211
    %358 = vmatpush.msra.mxu0 %v210
    %359 = vmatpush.msra.mxu0 %v209
    %360 = vmatpush.msra.mxu0 %v208
    %361 = vmatpush.msra.mxu0 %v207
    %362 = vmatpush.msra.mxu0 %v206
    %363 = vmatpush.msra.mxu0 %v205
    %364 = vmatpush.msra.mxu0 %v204
    %365 = vmatpush.msra.mxu0 %v203
    %366 = vmatpush.msra.mxu0 %v202
    %367 = vmatpush.msra.mxu0 %v201
    %368 = vmatpush.msra.mxu0 %v200
    %369 = vmatmul.f32.gmra.mxu0 %v102
    %v370 = vpop.f32.mrf.mxu0
    %v371 = vadd.f32 %v351, %v370
    %372 = vdwg.mxu0
    %373 = vmatpush.msra.mxu0 %v231
    %374 = vmatpush.msra.mxu0 %v230
    %375 = vmatpush.msra.mxu0 %v229
    %376 = vmatpush.msra.mxu0 %v228
    %377 = vmatpush.msra.mxu0 %v227
    %378 = vmatpush.msra.mxu0 %v226
    %379 = vmatpush.msra.mxu0 %v225
    %380 = vmatpush.msra.mxu0 %v224
    %381 = vmatpush.msra.mxu0 %v223
    %382 = vmatpush.msra.mxu0 %v222
    %383 = vmatpush.msra.mxu0 %v221
    %384 = vmatpush.msra.mxu0 %v220
    %385 = vmatpush.msra.mxu0 %v219
    %386 = vmatpush.msra.mxu0 %v218
    %387 = vmatpush.msra.mxu0 %v217
    %388 = vmatpush.msra.mxu0 %v216
    %389 = vmatmul.f32.gmra.mxu0 %v103
    %v390 = vpop.f32.mrf.mxu0
    %v391 = vadd.f32 %v371, %v390
    %392 = vdwg.mxu0
    %v393 = vmax.f32 %v391, 0.0
    %v394 = vld [vmem:[#allocation7] sm:$0xff]
    %v395 = vld [vmem:[#allocation7 + $0x8] sm:$0xff]
    %v396 = vld [vmem:[#allocation7 + $0x10] sm:$0xff]
    %v397 = vld [vmem:[#allocation7 + $0x18] sm:$0xff]
    %v398 = vld [vmem:[#allocation7 + $0x20] sm:$0xff]
    %v399 = vld [vmem:[#allocation7 + $0x28] sm:$0xff]
    %v400 = vld [vmem:[#allocation7 + $0x30] sm:$0xff]
    %v401 = vld [vmem:[#allocation7 + $0x38] sm:$0xff]
    %v402 = vld [vmem:[#allocation7 + $0x40] sm:$0xff]
    %v403 = vld [vmem:[#allocation7 + $0x48] sm:$0xff]
    %v404 = vld [vmem:[#allocation7 + $0x50] sm:$0xff]
    %v405 = vld [vmem:[#allocation7 + $0x58] sm:$0xff]
    %v406 = vld [vmem:[#allocation7 + $0x60] sm:$0xff]
    %v407 = vld [vmem:[#allocation7 + $0x68] sm:$0xff]
    %v408 = vld [vmem:[#allocation7 + $0x70] sm:$0xff]
    %v409 = vld [vmem:[#allocation7 + $0x78] sm:$0xff]
    %v410 = vperm.slane %v95, 1
    %411 = vmatpush.msra.mxu0 %v409
    %412 = vmatpush.msra.mxu0 %v408
    %413 = vmatpush.msra.mxu0 %v407
    %414 = vmatpush.msra.mxu0 %v406
    %415 = vmatpush.msra.mxu0 %v405
    %416 = vmatpush.msra.mxu0 %v404
    %417 = vmatpush.msra.mxu0 %v403
    %418 = vmatpush.msra.mxu0 %v402
    %419 = vmatpush.msra.mxu0 %v401
    %420 = vmatpush.msra.mxu0 %v400
    %421 = vmatpush.msra.mxu0 %v399
    %422 = vmatpush.msra.mxu0 %v398
    %423 = vmatpush.msra.mxu0 %v397
    %424 = vmatpush.msra.mxu0 %v396
    %425 = vmatpush.msra.mxu0 %v395
    %426 = vmatpush.msra.mxu0 %v394
    %427 = vmatmul.f32.gmra.mxu0 %v393
    %v428 = vpop.f32.mrf.mxu0
    %v429 = vadd.f32 %v410, %v428
    %430 = vdwg.mxu0
    %v431 = vmax.f32 %v429, 0.0
    %v432 = vld [vmem:[#allocation8] sm:$0xff]
    %v433 = vld [vmem:[#allocation8 + $0x8] sm:$0xff]
    %v434 = vld [vmem:[#allocation8 + $0x10] sm:$0xff]
    %v435 = vld [vmem:[#allocation8 + $0x18] sm:$0xff]
    %v436 = vld [vmem:[#allocation8 + $0x20] sm:$0xff]
    %v437 = vld [vmem:[#allocation8 + $0x28] sm:$0xff]
    %v438 = vld [vmem:[#allocation8 + $0x30] sm:$0xff]
    %v439 = vld [vmem:[#allocation8 + $0x38] sm:$0xff]
    %v440 = vld [vmem:[#allocation8 + $0x40] sm:$0xff]
    %v441 = vld [vmem:[#allocation8 + $0x48] sm:$0xff]
    %v442 = vld [vmem:[#allocation8 + $0x50] sm:$0xff]
    %v443 = vld [vmem:[#allocation8 + $0x58] sm:$0xff]
    %v444 = vld [vmem:[#allocation8 + $0x60] sm:$0xff]
    %v445 = vld [vmem:[#allocation8 + $0x68] sm:$0xff]
    %v446 = vld [vmem:[#allocation8 + $0x70] sm:$0xff]
    %v447 = vld [vmem:[#allocation8 + $0x78] sm:$0xff]
    %v448 = vperm.slane %v95, 2
    %449 = vmatpush.msra.mxu0 %v447
    %450 = vmatpush.msra.mxu0 %v446
    %451 = vmatpush.msra.mxu0 %v445
    %452 = vmatpush.msra.mxu0 %v444
    %453 = vmatpush.msra.mxu0 %v443
    %454 = vmatpush.msra.mxu0 %v442
    %455 = vmatpush.msra.mxu0 %v441
    %456 = vmatpush.msra.mxu0 %v440
    %457 = vmatpush.msra.mxu0 %v439
    %458 = vmatpush.msra.mxu0 %v438
    %459 = vmatpush.msra.mxu0 %v437
    %460 = vmatpush.msra.mxu0 %v436
    %461 = vmatpush.msra.mxu0 %v435
    %462 = vmatpush.msra.mxu0 %v434
    %463 = vmatpush.msra.mxu0 %v433
    %464 = vmatpush.msra.mxu0 %v432
    %465 = vmatmul.f32.gmra.mxu0 %v431
    %v466 = vpop.f32.mrf.mxu0
    %v467 = vadd.f32 %v448, %v466
    %468 = vdwg.mxu0
    %469 = vst [vmem:[#allocation11] sm:$0xff] %v467
    // Predicated region
    $region42: #{tpu_custom_call.1} parent=1 // pred_check
      _
    $region43: #{tpu_custom_call.1} parent=1 // pred_check_branch
      %471 = sbr.rel (0) target = $region45
    $region44: #{tpu_custom_call.1} parent=1 // pred_region
      %473 = vsyncadd [#allocation4], 0
      %s475 = sshll.u32 [#allocation11], 4
      %s476 = int_to_ptr.vmem [resolvable:$true] %s475
      %s477 = sshll.u32 %s5, 4
      %s478 = int_to_ptr.hbm [resolvable:$true] %s477
      %480 = dma.vmem_to_hbm [thread:$0]  %s476, 128, %s478, [#allocation4]
    $region45: #{tpu_custom_call.1} parent=1 // pred_fallthru
      _
    // Predicated region
    $region46: #{tpu_custom_call.1} parent=1 // pred_check
      _
    $region47: #{tpu_custom_call.1} parent=1 // pred_check_branch
      %482 = sbr.rel (0) target = $region49
    $region48: #{tpu_custom_call.1} parent=1 // pred_region
      %484 = dma.done [#allocation4], 128
    $region49: #{tpu_custom_call.1} parent=1 // pred_fallthru
      _
    %485 = vsyncpa [#allocation3], 1
    %486 = vsyncpa [#allocation6], 1
    %487 = vsyncpa [#allocation9], 1
    %488 = vsyncpa [#allocation4], 1

</llo_original>
